<compile_context>
chip_gen: v5e
topology: v5e:2x2
jax: 0.10.0
libtpu: 0.0.40
codegen_flags: <defaults>
</compile_context>

<pallas_src>
import functools

import jax
import jax.numpy as jnp
import numpy as np
from jax.experimental import pallas as pl
from jax.experimental.pallas import tpu as pltpu


def _round_up(x, m):
    return ((x + m - 1) // m) * m


def _pad2(x, rows, cols):
    r, c = x.shape
    if r == rows and c == cols:
        return x
    return jnp.pad(x, ((0, rows - r), (0, cols - c)))


def _sage_kernel_agg_first(a_ref, xs_ref, xd_ref, wcat_ref, b_ref, out_ref, acc_ref,
                           *, fin, apply_relu):
    """Aggregate-then-transform.

    acc[:, :fin] holds x_dst, acc[:, fin:] accumulates A_tile @ X_src_tile over the
    src (reduction) axis; the finalize step does ONE fused matmul
    [TM, 2*fin] @ [[W_self]; [W_neigh]] + bias (+ ReLU).
    """
    s = pl.program_id(1)

    @pl.when(s == 0)
    def _init():
        acc_ref[:, :fin] = xd_ref[...].astype(jnp.float32)
        acc_ref[:, fin:] = jnp.zeros(xd_ref.shape, jnp.float32)

    acc_ref[:, fin:] += jnp.dot(a_ref[...], xs_ref[...],
                                preferred_element_type=jnp.float32)

    @pl.when(s == pl.num_programs(1) - 1)
    def _finalize():
        h = jnp.dot(acc_ref[...].astype(wcat_ref.dtype), wcat_ref[...],
                    preferred_element_type=jnp.float32)
        h = h + b_ref[...]
        if apply_relu:
            h = jnp.maximum(h, 0.0)
        out_ref[...] = h.astype(out_ref.dtype)


def _sage_kernel_transform_first(a_ref, xs_ref, xd_ref, ws_ref, wn_ref, b_ref,
                                 out_ref, acc_ref, *, apply_relu):
    """Transform-then-aggregate: acc += A_tile @ (X_src_tile @ W_neigh).

    Cheaper when out_dim < in_dim and num_src >> num_dst. The self transform is
    folded into the init step (once per dst tile).
    """
    s = pl.program_id(1)

    @pl.when(s == 0)
    def _init():
        acc_ref[...] = jnp.dot(xd_ref[...], ws_ref[...],
                               preferred_element_type=jnp.float32)

    z = jnp.dot(xs_ref[...], wn_ref[...], preferred_element_type=jnp.float32)
    acc_ref[...] += jnp.dot(a_ref[...], z.astype(a_ref.dtype),
                            preferred_element_type=jnp.float32)

    @pl.when(s == pl.num_programs(1) - 1)
    def _finalize():
        h = acc_ref[...] + b_ref[...]
        if apply_relu:
            h = jnp.maximum(h, 0.0)
        out_ref[...] = h.astype(out_ref.dtype)


def sage_layer(a, x, w_self, w_neigh, b, *, apply_relu,
               tile_m=128, tile_s=256, compute_dtype=jnp.bfloat16, order="auto"):
    """One SAGEConv('mean') layer. a: [num_dst, num_src] row-normalized mean
    adjacency; x: [num_src, in_dim]; returns [num_dst, out_dim] f32."""
    num_dst, num_src = a.shape
    in_dim = x.shape[1]
    out_dim = w_self.shape[1]

    # Tile sizes: sublane-dim multiples of 8, lane-dim multiples of 128.
    tm = min(tile_m, _round_up(num_dst, 8))
    ts = min(tile_s, _round_up(num_src, 128))
    md = _round_up(num_dst, tm)
    ms = _round_up(num_src, ts)
    fin = _round_up(in_dim, 128)
    fout = _round_up(out_dim, 128)
    grid_m, grid_s = md // tm, ms // ts

    # Matmul-ordering dispatch by (padded) FLOP count.
    flops_agg = md * ms * fin + md * (2 * fin) * fout
    flops_tf = grid_m * ms * fin * fout + md * ms * fout + md * fin * fout
    if order == "auto":
        order = "transform_first" if flops_tf < flops_agg else "agg_first"
    assert order in ("agg_first", "transform_first")

    # Zero-padding keeps results exact: padded A rows/cols and weight rows are 0.
    a_p = _pad2(a, md, ms).astype(compute_dtype)
    xs_p = _pad2(x, ms, fin).astype(compute_dtype)
    xd_p = _pad2(x[:num_dst], md, fin).astype(compute_dtype)
    ws_p = _pad2(w_self, fin, fout).astype(compute_dtype)
    wn_p = _pad2(w_neigh, fin, fout).astype(compute_dtype)
    b_p = _pad2(b.reshape(1, -1), 1, fout).astype(jnp.float32)

    a_spec = pl.BlockSpec((tm, ts), lambda i, s: (i, s))
    xs_spec = pl.BlockSpec((ts, fin), lambda i, s: (s, 0))
    xd_spec = pl.BlockSpec((tm, fin), lambda i, s: (i, 0))
    b_spec = pl.BlockSpec((1, fout), lambda i, s: (0, 0))
    out_spec = pl.BlockSpec((tm, fout), lambda i, s: (i, 0))

    itemsize = np.dtype(compute_dtype).itemsize
    bytes_accessed = ((md * ms + ms * fin + md * fin + 2 * fin * fout) * itemsize
                      + fout * 4 + md * fout * 4)

    if order == "agg_first":
        wcat_p = jnp.concatenate([ws_p, wn_p], axis=0)   # [2*fin, fout]
        kernel = functools.partial(_sage_kernel_agg_first, fin=fin,
                                   apply_relu=apply_relu)
        args = (a_p, xs_p, xd_p, wcat_p, b_p)
        in_specs = [a_spec, xs_spec, xd_spec,
                    pl.BlockSpec((2 * fin, fout), lambda i, s: (0, 0)), b_spec]
        acc_shape = (tm, 2 * fin)
        flops = 2 * flops_agg
    else:
        kernel = functools.partial(_sage_kernel_transform_first,
                                   apply_relu=apply_relu)
        args = (a_p, xs_p, xd_p, ws_p, wn_p, b_p)
        w_spec = pl.BlockSpec((fin, fout), lambda i, s: (0, 0))
        in_specs = [a_spec, xs_spec, xd_spec, w_spec, w_spec, b_spec]
        acc_shape = (tm, fout)
        flops = 2 * flops_tf

    out_p = pl.pallas_call(
        kernel,
        out_shape=jax.ShapeDtypeStruct((md, fout), jnp.float32),
        grid_spec=pltpu.PrefetchScalarGridSpec(
            num_scalar_prefetch=0,
            grid=(grid_m, grid_s),               # reduction (src) axis last
            in_specs=in_specs,
            out_specs=out_spec,
            scratch_shapes=[pltpu.VMEM(acc_shape, jnp.float32)],
        ),
        compiler_params=pltpu.CompilerParams(
            dimension_semantics=("parallel", "arbitrary")),
        cost_estimate=pl.CostEstimate(flops=int(flops), transcendentals=0,
                                      bytes_accessed=int(bytes_accessed)),
    )(*args)

    return out_p[:num_dst, :out_dim]


def sage_forward(adj_mats, x, params, *, compute_dtype=jnp.bfloat16):
    """adj_mats: list of dense row-normalized [num_dst, num_src] mean-aggregation
    matrices (one per block). x: [num_src0, in_feats]. params: list of
    (w_self, w_neigh, bias) per layer."""
    h = x
    n_layers = len(params)
    for i, (a, (w_self, w_neigh, b)) in enumerate(zip(adj_mats, params)):
        last = (i == n_layers - 1)
        h = sage_layer(a, h, w_self, w_neigh, b, apply_relu=not last,
                       compute_dtype=compute_dtype)
        # TODO(synk): dropout omitted (eval mode => identity); no RNG mask applied.
    return h


def make_mean_adj(key, num_dst, num_src, p=0.4):
    """Dense random bipartite adjacency, row-normalized for 'mean' aggregation."""
    mask = (jax.random.uniform(key, (num_dst, num_src)) < p).astype(jnp.float32)
    # guarantee at least one neighbor per dst node (self edge: dst i -> src i)
    mask = jnp.maximum(mask, jnp.eye(num_dst, num_src, dtype=jnp.float32))
    deg = jnp.maximum(mask.sum(axis=1, keepdims=True), 1.0)
    return mask / deg


def init_params(key, in_feats, n_hidden, n_classes, n_layers):
    params = []
    for i in range(n_layers):
        in_dim = in_feats if i == 0 else n_hidden
        out_dim = n_classes if i == n_layers - 1 else n_hidden
        key, k1, k2, k3 = jax.random.split(key, 4)
        scale = 1.0 / np.sqrt(in_dim)
        w_self = jax.random.uniform(k1, (in_dim, out_dim), jnp.float32, -scale, scale)
        w_neigh = jax.random.uniform(k2, (in_dim, out_dim), jnp.float32, -scale, scale)
        # non-zero bias so the bias path is actually exercised by the test
        b = 0.1 * jax.random.normal(k3, (1, out_dim), jnp.float32)
        params.append((w_self, w_neigh, b))
    return params


def sage_reference(adj_mats, x, params):
    """Pure-JAX f32 reference for correctness check."""
    h = x
    n_layers = len(params)
    for i, (a, (w_self, w_neigh, b)) in enumerate(zip(adj_mats, params)):
        num_dst = a.shape[0]
        h_dst = h[:num_dst]
        h = h_dst @ w_self + (a @ h) @ w_neigh + b
        if i != n_layers - 1:
            h = jnp.maximum(h, 0.0)
    return h


if __name__ == "__main__":
    key = jax.random.PRNGKey(0)

    # Small synthetic mini-batch: 2-layer SAGE.
    in_feats, n_hidden, n_classes, n_layers = 16, 32, 8, 2
    num_src0, num_dst0 = 32, 16      # block 0: 32 src nodes -> 16 dst nodes
    num_src1, num_dst1 = 16, 8       # block 1: 16 src nodes ->  8 dst nodes

    key, kx, ka0, ka1, kp = jax.random.split(key, 5)
    x = jax.random.normal(kx, (num_src0, in_feats), jnp.float32)
    adj_mats = [
        make_mean_adj(ka0, num_dst0, num_src0),
        make_mean_adj(ka1, num_dst1, num_src1),
    ]
    params = init_params(kp, in_feats, n_hidden, n_classes, n_layers)

    ref = sage_reference(adj_mats, x, params)

    # f32 compute path (tight-ish tolerance; allows for MXU precision-mode diffs)
    out_f32 = jax.block_until_ready(
        sage_forward(adj_mats, x, params, compute_dtype=jnp.float32))
    np.testing.assert_allclose(np.asarray(out_f32), np.asarray(ref),
                               rtol=2e-2, atol=2e-2)

    # default fast path: bf16 inputs, f32 accumulation
    out = jax.block_until_ready(sage_forward(adj_mats, x, params))
    np.testing.assert_allclose(np.asarray(out), np.asarray(ref),
                               rtol=5e-2, atol=5e-2)

    # also exercise the transform-first (A @ (X @ W_neigh)) kernel variant
    w_self, w_neigh, b = params[0]
    ref_l0 = x[:num_dst0] @ w_self + (adj_mats[0] @ x) @ w_neigh + b
    out_l0 = jax.block_until_ready(
        sage_layer(adj_mats[0], x, w_self, w_neigh, b, apply_relu=False,
                   compute_dtype=jnp.float32, order="transform_first"))
    np.testing.assert_allclose(np.asarray(out_l0), np.asarray(ref_l0),
                               rtol=2e-2, atol=2e-2)

    assert out.shape == (num_dst1, n_classes)
    print("KERNEL_OK")
</pallas_src>

<mosaic_0001>
module attributes {stable_mosaic.version = 11 : i64} {
  func.func @_sage_kernel_agg_first(%arg0: i32, %arg1: i32, %arg2: memref<16x128xf32, #tpu.memory_space<vmem>>, %arg3: memref<128x128xf32, #tpu.memory_space<vmem>>, %arg4: memref<16x128xf32, #tpu.memory_space<vmem>>, %arg5: memref<256x128xf32, #tpu.memory_space<vmem>>, %arg6: memref<1x128xf32, #tpu.memory_space<vmem>>, %arg7: memref<16x128xf32, #tpu.memory_space<vmem>>, %arg8: memref<16x256xf32, #tpu.memory_space<vmem>>) attributes {dimension_semantics = [#tpu.dimension_semantics<parallel>, #tpu.dimension_semantics<arbitrary>], iteration_bounds = array<i64: 1, 1>, scalar_prefetch = 0 : i64, scratch_operands = 1 : i64, tpu.core_type = #tpu.core_type<tc>, window_params = [{transform_indices = @transform_0, window_bounds = array<i64: 16, 128>}, {transform_indices = @transform_1, window_bounds = array<i64: 128, 128>}, {transform_indices = @transform_2, window_bounds = array<i64: 16, 128>}, {pipeline_mode = #tpu.pipeline_mode<synchronous>, transform_indices = @transform_3, window_bounds = array<i64: 256, 128>}, {pipeline_mode = #tpu.pipeline_mode<synchronous>, transform_indices = @transform_4, window_bounds = array<i64: 1, 128>}, {transform_indices = @transform_5, window_bounds = array<i64: 16, 128>}]} {
    %c0_i32 = arith.constant 0 : i32
    %0 = arith.cmpi eq, %arg1, %c0_i32 : i32
    %1 = arith.extui %0 : i1 to i32
    %c0_i32_0 = arith.constant 0 : i32
    %2 = arith.cmpi ne, %1, %c0_i32_0 : i32
    scf.if %2 {
      %c0_9 = arith.constant 0 : index
      %c0_10 = arith.constant 0 : index
      %12 = vector.load %arg4[%c0_9, %c0_10] : memref<16x128xf32, #tpu.memory_space<vmem>>, vector<16x128xf32>
      %c0_11 = arith.constant 0 : index
      %c0_12 = arith.constant 0 : index
      %13 = vector.load %arg8[%c0_11, %c0_12] : memref<16x256xf32, #tpu.memory_space<vmem>>, vector<16x128xf32>
      tpu.vector_store %arg8[%c0_11, %c0_12], %12 {strides = array<i32>} : memref<16x256xf32, #tpu.memory_space<vmem>>, vector<16x128xf32>,
      %cst_13 = arith.constant 0.000000e+00 : f32
      %14 = vector.broadcast %cst_13 : f32 to vector<16x128xf32>
      %c0_14 = arith.constant 0 : index
      %c128_15 = arith.constant 128 : index
      %15 = vector.load %arg8[%c0_14, %c128_15] : memref<16x256xf32, #tpu.memory_space<vmem>>, vector<16x128xf32>
      tpu.vector_store %arg8[%c0_14, %c128_15], %14 {strides = array<i32>} : memref<16x256xf32, #tpu.memory_space<vmem>>, vector<16x128xf32>,
    } else {
    }
    %c0 = arith.constant 0 : index
    %c128 = arith.constant 128 : index
    %3 = vector.load %arg8[%c0, %c128] : memref<16x256xf32, #tpu.memory_space<vmem>>, vector<16x128xf32>
    %c0_1 = arith.constant 0 : index
    %c0_2 = arith.constant 0 : index
    %4 = vector.load %arg2[%c0_1, %c0_2] : memref<16x128xf32, #tpu.memory_space<vmem>>, vector<16x128xf32>
    %c0_3 = arith.constant 0 : index
    %c0_4 = arith.constant 0 : index
    %5 = vector.load %arg3[%c0_3, %c0_4] : memref<128x128xf32, #tpu.memory_space<vmem>>, vector<128x128xf32>
    %cst = arith.constant dense<0.000000e+00> : vector<16x128xf32>
    %6 = tpu.matmul %4, %5, %cst {dimension_numbers = #tpu.dot_dimension_numbers<[1], [0], [0], [1], [0, 0, 1, 1], [], []>} : vector<16x128xf32>, vector<128x128xf32>, vector<16x128xf32> -> vector<16x128xf32>
    %7 = arith.addf %3, %6 : vector<16x128xf32>
    %c0_5 = arith.constant 0 : index
    %c128_6 = arith.constant 128 : index
    %8 = vector.load %arg8[%c0_5, %c128_6] : memref<16x256xf32, #tpu.memory_space<vmem>>, vector<16x128xf32>
    tpu.vector_store %arg8[%c0_5, %c128_6], %7 {strides = array<i32>} : memref<16x256xf32, #tpu.memory_space<vmem>>, vector<16x128xf32>,
    %c0_i32_7 = arith.constant 0 : i32
    %9 = arith.cmpi eq, %arg1, %c0_i32_7 : i32
    %10 = arith.extui %9 : i1 to i32
    %c0_i32_8 = arith.constant 0 : i32
    %11 = arith.cmpi ne, %10, %c0_i32_8 : i32
    scf.if %11 {
      %c0_9 = arith.constant 0 : index
      %c0_10 = arith.constant 0 : index
      %12 = vector.load %arg8[%c0_9, %c0_10] : memref<16x256xf32, #tpu.memory_space<vmem>>, vector<16x256xf32>
      %c0_11 = arith.constant 0 : index
      %c0_12 = arith.constant 0 : index
      %13 = vector.load %arg5[%c0_11, %c0_12] : memref<256x128xf32, #tpu.memory_space<vmem>>, vector<256x128xf32>
      %cst_13 = arith.constant dense<0.000000e+00> : vector<16x128xf32>
      %14 = tpu.matmul %12, %13, %cst_13 {dimension_numbers = #tpu.dot_dimension_numbers<[1], [0], [0], [1], [0, 0, 1, 1], [], []>} : vector<16x256xf32>, vector<256x128xf32>, vector<16x128xf32> -> vector<16x128xf32>
      %c0_14 = arith.constant 0 : index
      %c0_15 = arith.constant 0 : index
      %15 = vector.load %arg6[%c0_14, %c0_15] : memref<1x128xf32, #tpu.memory_space<vmem>>, vector<1x128xf32>
      %16 = vector.broadcast %15 : vector<1x128xf32> to vector<16x128xf32>
      %17 = arith.addf %14, %16 : vector<16x128xf32>
      %cst_16 = arith.constant 0.000000e+00 : f32
      %18 = vector.broadcast %cst_16 : f32 to vector<16x128xf32>
      %19 = arith.maximumf %17, %18 : vector<16x128xf32>
      %c0_17 = arith.constant 0 : index
      %c0_18 = arith.constant 0 : index
      %20 = vector.load %arg7[%c0_17, %c0_18] : memref<16x128xf32, #tpu.memory_space<vmem>>, vector<16x128xf32>
      tpu.vector_store %arg7[%c0_17, %c0_18], %19 {strides = array<i32>} : memref<16x128xf32, #tpu.memory_space<vmem>>, vector<16x128xf32>,
    } else {
    }
    return
  }
  func.func @transform_0(%arg0: i32, %arg1: i32) -> (i32, i32) {
    %c0_i32 = arith.constant 0 : i32
    return %arg0, %arg1 : i32, i32
  }
  func.func @transform_1(%arg0: i32, %arg1: i32) -> (i32, i32) {
    %c0_i32 = arith.constant 0 : i32
    %c0_i32_0 = arith.constant 0 : i32
    return %arg1, %c0_i32 : i32, i32
  }
  func.func @transform_2(%arg0: i32, %arg1: i32) -> (i32, i32) {
    %c0_i32 = arith.constant 0 : i32
    %c0_i32_0 = arith.constant 0 : i32
    return %arg0, %c0_i32 : i32, i32
  }
  func.func @transform_3(%arg0: i32, %arg1: i32) -> (i32, i32) {
    %c0_i32 = arith.constant 0 : i32
    %c0_i32_0 = arith.constant 0 : i32
    %c0_i32_1 = arith.constant 0 : i32
    return %c0_i32, %c0_i32_0 : i32, i32
  }
  func.func @transform_4(%arg0: i32, %arg1: i32) -> (i32, i32) {
    %c0_i32 = arith.constant 0 : i32
    %c0_i32_0 = arith.constant 0 : i32
    %c0_i32_1 = arith.constant 0 : i32
    return %c0_i32, %c0_i32_0 : i32, i32
  }
  func.func @transform_5(%arg0: i32, %arg1: i32) -> (i32, i32) {
    %c0_i32 = arith.constant 0 : i32
    %c0_i32_0 = arith.constant 0 : i32
    return %arg0, %c0_i32 : i32, i32
  }
}

</mosaic_0001>

<llo_original>
// kernel: tpu_custom_call.1
$region0: #{tpu_custom_call.1}
  #allocation0 [shape = 'u32[]', space=smem, size = 0x4, offset = 0x4, fixed_abs, tag = 'smem constant byte address 0x4 - core index']
  #allocation1 [shape = 'u32[72,128]{1,0:T(1,128)}', space=vmem, size = 0x9000, scoped, tag = 'internal scratch']
  #allocation2 [shape = 'f32[16,256]{1,0:T(8,128)}', space=vmem, size = 0x4000, scoped, tag = 'scratch operand']
  %s0 = inlined_call_operand.hbm [shape: f32[16,128], index: 0, kind: input, shape index: {}]
  %s1 = inlined_call_operand.hbm [shape: f32[128,128], index: 1, kind: input, shape index: {}]
  %s2 = inlined_call_operand.hbm [shape: f32[16,128], index: 2, kind: input, shape index: {}]
  %s3 = inlined_call_operand.hbm [shape: f32[256,128], index: 3, kind: input, shape index: {}]
  %s4 = inlined_call_operand.vmem [shape: f32[1,128], index: 4, kind: input, shape index: {}]
  %s5 = inlined_call_operand.hbm [shape: f32[16,128], index: 5, kind: output, shape index: {}]
  %s6 = sld [smem:[#allocation0]]
  $region54: #{tpu_custom_call.1} parent=0
    _
  %s8 = ssub.s32 1, %s6
  %s9 = scalar_select 0, %s8, %s6
  $region1: #{tpu_custom_call.1} parent=0
    #allocation3 [shape = 'u8[8192]{0}', space=vmem, size = 0x2000, scoped, tag = 'input window, operand 0, single buffered']
    #allocation4 [shape = 's32[1]{0}', space=sflag, size = 0x4, scoped, tag = 'scoped memory for tpu_custom_call.1']
    #allocation5 [shape = 's32[1]{0}', space=sflag, size = 0x4, scoped, tag = 'scoped memory for tpu_custom_call.1']
    #allocation6 [shape = 'u8[65536]{0}', space=vmem, size = 0x10000, scoped, tag = 'input window, operand 1, single buffered']
    #allocation7 [shape = 's32[1]{0}', space=sflag, size = 0x4, scoped, tag = 'scoped memory for tpu_custom_call.1']
    #allocation8 [shape = 'u8[8192]{0}', space=vmem, size = 0x2000, scoped, tag = 'input window, operand 2, single buffered']
    #allocation9 [shape = 'u8[131072]{0}', space=vmem, size = 0x20000, scoped, tag = 'input window, operand 3, single buffered']
    #allocation10 [shape = 's32[1]{0}', space=sflag, size = 0x4, scoped, tag = 'scoped memory for tpu_custom_call.1']
    #allocation11 [shape = 'u8[8192]{0}', space=vmem, size = 0x2000, scoped, tag = 'output window, operand 0, single buffered']
    %10 = vsyncpa [#allocation4], 0
    %11 = vsyncpa [#allocation7], 0
    %12 = vsyncpa [#allocation10], 0
    %13 = vsyncpa [#allocation5], 0
    // Predicated region
    $region2: #{tpu_custom_call.1} parent=1 // pred_check
      _
    $region3: #{tpu_custom_call.1} parent=1 // pred_check_branch
      %15 = sbr.rel (0) target = $region5
    $region4: #{tpu_custom_call.1} parent=1 // pred_region
      %17 = vsyncadd [#allocation4], 0
      %s18 = sshll.u32 %s0, 4
      %s19 = int_to_ptr.hbm [resolvable:$true] %s18
      %s20 = sshll.u32 [#allocation3], 4
      %s21 = int_to_ptr.vmem [resolvable:$true] %s20
      %26 = dma.hbm_to_vmem [thread:$0]  %s19, 256, %s21, [#allocation4], 128, 128, 8
    $region5: #{tpu_custom_call.1} parent=1 // pred_fallthru
      _
    // Predicated region
    $region6: #{tpu_custom_call.1} parent=1 // pred_check
      _
    $region7: #{tpu_custom_call.1} parent=1 // pred_check_branch
      %28 = sbr.rel (0) target = $region9
    $region8: #{tpu_custom_call.1} parent=1 // pred_region
      %30 = vsyncadd [#allocation7], 0
      %s31 = sshll.u32 %s1, 4
      %s32 = int_to_ptr.hbm [resolvable:$true] %s31
      %s33 = sshll.u32 [#allocation6], 4
      %s34 = int_to_ptr.vmem [resolvable:$true] %s33
      %39 = dma.hbm_to_vmem [thread:$0]  %s32, 2048, %s34, [#allocation7], 128, 128, 8
    $region9: #{tpu_custom_call.1} parent=1 // pred_fallthru
      _
    // Predicated region
    $region10: #{tpu_custom_call.1} parent=1 // pred_check
      _
    $region11: #{tpu_custom_call.1} parent=1 // pred_check_branch
      %41 = sbr.rel (0) target = $region13
    $region12: #{tpu_custom_call.1} parent=1 // pred_region
      %43 = vsyncadd [#allocation7], 0
      %s44 = sshll.u32 %s2, 4
      %s45 = int_to_ptr.hbm [resolvable:$true] %s44
      %s46 = sshll.u32 [#allocation8], 4
      %s47 = int_to_ptr.vmem [resolvable:$true] %s46
      %52 = dma.hbm_to_vmem [thread:$0]  %s45, 256, %s47, [#allocation7], 128, 128, 8
    $region13: #{tpu_custom_call.1} parent=1 // pred_fallthru
      _
    // Predicated region
    $region14: #{tpu_custom_call.1} parent=1 // pred_check
      _
    $region15: #{tpu_custom_call.1} parent=1 // pred_check_branch
      %54 = sbr.rel (0) target = $region17
    $region16: #{tpu_custom_call.1} parent=1 // pred_region
      %56 = vsyncadd [#allocation10], 0
      %s57 = sshll.u32 %s3, 4
      %s58 = int_to_ptr.hbm [resolvable:$true] %s57
      %s59 = sshll.u32 [#allocation9], 4
      %s60 = int_to_ptr.vmem [resolvable:$true] %s59
      %65 = dma.hbm_to_vmem [thread:$0]  %s58, 4096, %s60, [#allocation10], 128, 128, 8
    $region17: #{tpu_custom_call.1} parent=1 // pred_fallthru
      _
    // Predicated region
    $region18: #{tpu_custom_call.1} parent=1 // pred_check
      _
    $region19: #{tpu_custom_call.1} parent=1 // pred_check_branch
      %67 = sbr.rel (0) target = $region21
    $region20: #{tpu_custom_call.1} parent=1 // pred_region
      _
    $region21: #{tpu_custom_call.1} parent=1 // pred_fallthru
      _
    // Predicated region
    $region22: #{tpu_custom_call.1} parent=1 // pred_check
      _
    $region23: #{tpu_custom_call.1} parent=1 // pred_check_branch
      %69 = sbr.rel (0) target = $region25
    $region24: #{tpu_custom_call.1} parent=1 // pred_region
      %71 = dma.done [#allocation4], 256
    $region25: #{tpu_custom_call.1} parent=1 // pred_fallthru
      _
    // Predicated region
    $region26: #{tpu_custom_call.1} parent=1 // pred_check
      _
    $region27: #{tpu_custom_call.1} parent=1 // pred_check_branch
      %73 = sbr.rel (0) target = $region29
    $region28: #{tpu_custom_call.1} parent=1 // pred_region
      %75 = dma.done [#allocation7], 2048
    $region29: #{tpu_custom_call.1} parent=1 // pred_fallthru
      _
    // Predicated region
    $region30: #{tpu_custom_call.1} parent=1 // pred_check
      _
    $region31: #{tpu_custom_call.1} parent=1 // pred_check_branch
      %77 = sbr.rel (0) target = $region33
    $region32: #{tpu_custom_call.1} parent=1 // pred_region
      %79 = dma.done [#allocation7], 256
    $region33: #{tpu_custom_call.1} parent=1 // pred_fallthru
      _
    // Predicated region
    $region34: #{tpu_custom_call.1} parent=1 // pred_check
      _
    $region35: #{tpu_custom_call.1} parent=1 // pred_check_branch
      %81 = sbr.rel (0) target = $region37
    $region36: #{tpu_custom_call.1} parent=1 // pred_region
      %83 = dma.done [#allocation10], 4096
    $region37: #{tpu_custom_call.1} parent=1 // pred_fallthru
      _
    %p84 = scmp.eq.s32.totalorder 0, 0
    // Predicated region
    $region38: #{tpu_custom_call.1} parent=1 // pred_check
      %p85 = pneg %p84
    $region39: #{tpu_custom_call.1} parent=1 // pred_check_branch
      %87 = sbr.rel (%p85) target = $region41
    $region40: #{tpu_custom_call.1} parent=1 // pred_region
      %v88 = vld [vmem:[#allocation8] sm:$0xff]
      %v89 = vld [vmem:[#allocation8 + $0x8] sm:$0xff]
      %90 = vst [vmem:[#allocation2] sm:$0xff] %v88
      %91 = vst [vmem:[#allocation2 + $0x10] sm:$0xff] %v89
      %92 = vst [vmem:[#allocation2 + $0x8] sm:$0xff] 0.0
      %93 = vst [vmem:[#allocation2 + $0x18] sm:$0xff] 0.0
    $region41: #{tpu_custom_call.1} parent=1 // pred_fallthru
      _
    %v94 = vld [vmem:[#allocation2 + $0x8] sm:$0xff]
    %v95 = vld [vmem:[#allocation2 + $0x18] sm:$0xff]
    %v96 = vld [vmem:[#allocation3] sm:$0xff]
    %v97 = vld [vmem:[#allocation3 + $0x8] sm:$0xff]
    %v98 = vld [vmem:[#allocation6] sm:$0xff]
    %v99 = vld [vmem:[#allocation6 + $0x8] sm:$0xff]
    %v100 = vld [vmem:[#allocation6 + $0x10] sm:$0xff]
    %v101 = vld [vmem:[#allocation6 + $0x18] sm:$0xff]
    %v102 = vld [vmem:[#allocation6 + $0x20] sm:$0xff]
    %v103 = vld [vmem:[#allocation6 + $0x28] sm:$0xff]
    %v104 = vld [vmem:[#allocation6 + $0x30] sm:$0xff]
    %v105 = vld [vmem:[#allocation6 + $0x38] sm:$0xff]
    %v106 = vld [vmem:[#allocation6 + $0x40] sm:$0xff]
    %v107 = vld [vmem:[#allocation6 + $0x48] sm:$0xff]
    %v108 = vld [vmem:[#allocation6 + $0x50] sm:$0xff]
    %v109 = vld [vmem:[#allocation6 + $0x58] sm:$0xff]
    %v110 = vld [vmem:[#allocation6 + $0x60] sm:$0xff]
    %v111 = vld [vmem:[#allocation6 + $0x68] sm:$0xff]
    %v112 = vld [vmem:[#allocation6 + $0x70] sm:$0xff]
    %v113 = vld [vmem:[#allocation6 + $0x78] sm:$0xff]
    %114 = vmatpush.msra.mxu0 %v113
    %115 = vmatpush.msra.mxu0 %v112
    %116 = vmatpush.msra.mxu0 %v111
    %117 = vmatpush.msra.mxu0 %v110
    %118 = vmatpush.msra.mxu0 %v109
    %119 = vmatpush.msra.mxu0 %v108
    %120 = vmatpush.msra.mxu0 %v107
    %121 = vmatpush.msra.mxu0 %v106
    %122 = vmatpush.msra.mxu0 %v105
    %123 = vmatpush.msra.mxu0 %v104
    %124 = vmatpush.msra.mxu0 %v103
    %125 = vmatpush.msra.mxu0 %v102
    %126 = vmatpush.msra.mxu0 %v101
    %127 = vmatpush.msra.mxu0 %v100
    %128 = vmatpush.msra.mxu0 %v99
    %129 = vmatpush.msra.mxu0 %v98
    %130 = vmatmul.f32.gmra.mxu0 %v96
    %v131 = vpop.f32.mrf.mxu0
    %v132 = vadd.f32 0.0, %v131
    %133 = vmatmul.f32.gmra.mxu0 %v97
    %v134 = vpop.f32.mrf.mxu0
    %v135 = vadd.f32 0.0, %v134
    %136 = vdwg.mxu0
    %v137 = vadd.f32 %v94, %v132
    %v138 = vadd.f32 %v95, %v135
    %139 = vst [vmem:[#allocation2 + $0x8] sm:$0xff] %v137
    %140 = vst [vmem:[#allocation2 + $0x18] sm:$0xff] %v138
    // Predicated region
    $region42: #{tpu_custom_call.1} parent=1 // pred_check
      %p141 = pneg %p84
    $region43: #{tpu_custom_call.1} parent=1 // pred_check_branch
      %143 = sbr.rel (%p141) target = $region45
    $region44: #{tpu_custom_call.1} parent=1 // pred_region
      %v144 = vld [vmem:[#allocation2] sm:$0xff]
      %v145 = vld [vmem:[#allocation2 + $0x8] sm:$0xff]
      %v146 = vld [vmem:[#allocation2 + $0x10] sm:$0xff]
      %v147 = vld [vmem:[#allocation2 + $0x18] sm:$0xff]
      %v148 = vld [vmem:[#allocation9] sm:$0xff]
      %v149 = vld [vmem:[#allocation9 + $0x8] sm:$0xff]
      %v150 = vld [vmem:[#allocation9 + $0x10] sm:$0xff]
      %v151 = vld [vmem:[#allocation9 + $0x18] sm:$0xff]
      %v152 = vld [vmem:[#allocation9 + $0x20] sm:$0xff]
      %v153 = vld [vmem:[#allocation9 + $0x28] sm:$0xff]
      %v154 = vld [vmem:[#allocation9 + $0x30] sm:$0xff]
      %v155 = vld [vmem:[#allocation9 + $0x38] sm:$0xff]
      %v156 = vld [vmem:[#allocation9 + $0x40] sm:$0xff]
      %v157 = vld [vmem:[#allocation9 + $0x48] sm:$0xff]
      %v158 = vld [vmem:[#allocation9 + $0x50] sm:$0xff]
      %v159 = vld [vmem:[#allocation9 + $0x58] sm:$0xff]
      %v160 = vld [vmem:[#allocation9 + $0x60] sm:$0xff]
      %v161 = vld [vmem:[#allocation9 + $0x68] sm:$0xff]
      %v162 = vld [vmem:[#allocation9 + $0x70] sm:$0xff]
      %v163 = vld [vmem:[#allocation9 + $0x78] sm:$0xff]
      %v164 = vld [vmem:[#allocation9 + $0x80] sm:$0xff]
      %v165 = vld [vmem:[#allocation9 + $0x88] sm:$0xff]
      %v166 = vld [vmem:[#allocation9 + $0x90] sm:$0xff]
      %v167 = vld [vmem:[#allocation9 + $0x98] sm:$0xff]
      %v168 = vld [vmem:[#allocation9 + $0xa0] sm:$0xff]
      %v169 = vld [vmem:[#allocation9 + $0xa8] sm:$0xff]
      %v170 = vld [vmem:[#allocation9 + $0xb0] sm:$0xff]
      %v171 = vld [vmem:[#allocation9 + $0xb8] sm:$0xff]
      %v172 = vld [vmem:[#allocation9 + $0xc0] sm:$0xff]
      %v173 = vld [vmem:[#allocation9 + $0xc8] sm:$0xff]
      %v174 = vld [vmem:[#allocation9 + $0xd0] sm:$0xff]
      %v175 = vld [vmem:[#allocation9 + $0xd8] sm:$0xff]
      %v176 = vld [vmem:[#allocation9 + $0xe0] sm:$0xff]
      %v177 = vld [vmem:[#allocation9 + $0xe8] sm:$0xff]
      %v178 = vld [vmem:[#allocation9 + $0xf0] sm:$0xff]
      %v179 = vld [vmem:[#allocation9 + $0xf8] sm:$0xff]
      %v180 = vld [vmem:[%s4] sm:$0x1]
      %v182 = vperm.slane %v180, 0
      %184 = vmatpush.msra.mxu0 %v163
      %185 = vmatpush.msra.mxu0 %v162
      %186 = vmatpush.msra.mxu0 %v161
      %187 = vmatpush.msra.mxu0 %v160
      %188 = vmatpush.msra.mxu0 %v159
      %189 = vmatpush.msra.mxu0 %v158
      %190 = vmatpush.msra.mxu0 %v157
      %191 = vmatpush.msra.mxu0 %v156
      %192 = vmatpush.msra.mxu0 %v155
      %193 = vmatpush.msra.mxu0 %v154
      %194 = vmatpush.msra.mxu0 %v153
      %195 = vmatpush.msra.mxu0 %v152
      %196 = vmatpush.msra.mxu0 %v151
      %197 = vmatpush.msra.mxu0 %v150
      %198 = vmatpush.msra.mxu0 %v149
      %199 = vmatpush.msra.mxu0 %v148
      %200 = vmatmul.f32.gmra.mxu0 %v144
      %v201 = vpop.f32.mrf.mxu0
      %v202 = vadd.f32 %v182, %v201
      %203 = vmatmul.f32.gmra.mxu0 %v146
      %v204 = vpop.f32.mrf.mxu0
      %v205 = vadd.f32 %v182, %v204
      %206 = vdwg.mxu0
      %207 = vmatpush.msra.mxu0 %v179
      %208 = vmatpush.msra.mxu0 %v178
      %209 = vmatpush.msra.mxu0 %v177
      %210 = vmatpush.msra.mxu0 %v176
      %211 = vmatpush.msra.mxu0 %v175
      %212 = vmatpush.msra.mxu0 %v174
      %213 = vmatpush.msra.mxu0 %v173
      %214 = vmatpush.msra.mxu0 %v172
      %215 = vmatpush.msra.mxu0 %v171
      %216 = vmatpush.msra.mxu0 %v170
      %217 = vmatpush.msra.mxu0 %v169
      %218 = vmatpush.msra.mxu0 %v168
      %219 = vmatpush.msra.mxu0 %v167
      %220 = vmatpush.msra.mxu0 %v166
      %221 = vmatpush.msra.mxu0 %v165
      %222 = vmatpush.msra.mxu0 %v164
      %223 = vmatmul.f32.gmra.mxu0 %v145
      %v224 = vpop.f32.mrf.mxu0
      %v225 = vadd.f32 %v202, %v224
      %226 = vmatmul.f32.gmra.mxu0 %v147
      %v227 = vpop.f32.mrf.mxu0
      %v228 = vadd.f32 %v205, %v227
      %229 = vdwg.mxu0
      %v230 = vmax.f32 %v225, 0.0
      %v231 = vmax.f32 %v228, 0.0
      %232 = vst [vmem:[#allocation11] sm:$0xff] %v230
      %233 = vst [vmem:[#allocation11 + $0x8] sm:$0xff] %v231
    $region45: #{tpu_custom_call.1} parent=1 // pred_fallthru
      _
    // Predicated region
    $region46: #{tpu_custom_call.1} parent=1 // pred_check
      _
    $region47: #{tpu_custom_call.1} parent=1 // pred_check_branch
      %235 = sbr.rel (0) target = $region49
    $region48: #{tpu_custom_call.1} parent=1 // pred_region
      %237 = vsyncadd [#allocation5], 0
      %s238 = sshll.u32 [#allocation11], 4
      %s239 = int_to_ptr.vmem [resolvable:$true] %s238
      %s240 = sshll.u32 %s5, 4
      %s241 = int_to_ptr.hbm [resolvable:$true] %s240
      %246 = dma.vmem_to_hbm [thread:$0]  %s239, 256, %s241, [#allocation5], 128, 128, 8
    $region49: #{tpu_custom_call.1} parent=1 // pred_fallthru
      _
    // Predicated region
    $region50: #{tpu_custom_call.1} parent=1 // pred_check
      _
    $region51: #{tpu_custom_call.1} parent=1 // pred_check_branch
      %248 = sbr.rel (0) target = $region53
    $region52: #{tpu_custom_call.1} parent=1 // pred_region
      %250 = dma.done [#allocation5], 256
    $region53: #{tpu_custom_call.1} parent=1 // pred_fallthru
      _
    %251 = vsyncpa [#allocation4], 1
    %252 = vsyncpa [#allocation7], 1
    %253 = vsyncpa [#allocation10], 1
    %254 = vsyncpa [#allocation5], 1

</llo_original>
